<compile_context>
chip_gen: v7x
topology: tpu7x:2x2x1
jax: 0.10.0
libtpu: 0.0.40
codegen_flags: <defaults>
</compile_context>

<pallas_src>
import numpy as np

import jax
import jax.numpy as jnp
from jax.experimental import pallas as pl
from jax.experimental.pallas import tpu as pltpu

LANE = 128
VMEM_CAP = 64 << 20          # v7x per-TensorCore VMEM; safe on v5e/v6e too
XW_RESIDENT_BUDGET = 8 << 20  # keep resident XW (x2 buffers) well under cap


def _pad_to(v, m):
    return ((v + m - 1) // m) * m


def _pad2d(x, rows, cols):
    r, c = x.shape
    return jnp.pad(x, ((0, rows - r), (0, cols - c)))


def _largest_tile(total, target):
    """Largest multiple of 128 that divides `total` and is <= target."""
    t = max((min(target, total) // LANE) * LANE, LANE)
    while t > LANE and total % t != 0:
        t -= LANE
    return t


def _vmem_limit(working_set_bytes):
    return int(min(VMEM_CAP, max(32 << 20, int(1.5 * working_set_bytes))))


# --------------------- pass 1: feature transform XW = X @ W ------------------
def feat_transform_kernel(x_ref, w_ref, o_ref):
    o_ref[...] = jnp.dot(
        x_ref[...], w_ref[...], preferred_element_type=jnp.float32
    ).astype(o_ref.dtype)


def feat_transform(x, w, *, tm):
    n, f = x.shape
    fo = w.shape[1]
    assert n % tm == 0
    itm = x.dtype.itemsize
    ws = 2 * tm * f * itm + 2 * f * fo * itm + 2 * tm * fo * itm
    return pl.pallas_call(
        feat_transform_kernel,
        out_shape=jax.ShapeDtypeStruct((n, fo), x.dtype),
        grid_spec=pltpu.PrefetchScalarGridSpec(
            num_scalar_prefetch=0,
            grid=(n // tm,),
            in_specs=[
                pl.BlockSpec((tm, f), lambda i: (i, 0)),
                pl.BlockSpec((f, fo), lambda i: (0, 0)),  # W resident
            ],
            out_specs=pl.BlockSpec((tm, fo), lambda i: (i, 0)),
        ),
        compiler_params=pltpu.CompilerParams(
            dimension_semantics=("parallel",),
            vmem_limit_bytes=_vmem_limit(ws),
        ),
        cost_estimate=pl.CostEstimate(
            flops=2 * n * f * fo,
            transcendentals=0,
            bytes_accessed=(n * f + f * fo + n * fo) * itm,
        ),
    )(x, w)


# ------------- pass 2: aggregation  out = An @ XW + b (+ optional relu) ------
def make_aggregate_kernel(apply_relu, tk, xw_resident):
    def kernel(blk_idx_ref, blk_cnt_ref, a_ref, xw_ref, b_ref, o_ref, acc_ref):
        i = pl.program_id(0)
        k = pl.program_id(1)

        @pl.when(k == 0)
        def _init():
            acc_ref[...] = jnp.zeros_like(acc_ref)

        # Skip the ragged tail of the per-row-tile nonzero-block list.
        @pl.when(k < blk_cnt_ref[i])
        def _accum():
            if xw_resident:
                col = pl.multiple_of(blk_idx_ref[i, k] * tk, tk)
                xw = xw_ref[pl.ds(col, tk), :]
            else:
                xw = xw_ref[...]
            acc_ref[...] += jnp.dot(
                a_ref[...], xw, preferred_element_type=jnp.float32
            )

        @pl.when(k == pl.num_programs(1) - 1)
        def _epilogue():
            out = acc_ref[...] + b_ref[...]
            if apply_relu:
                out = jnp.maximum(out, 0.0)
            o_ref[...] = out.astype(o_ref.dtype)

    return kernel


def aggregate(a, xw, b, blk_idx, blk_cnt, *, tm, tk, apply_relu, out_dtype,
              xw_resident, nnz_blocks):
    n = a.shape[0]
    fo = xw.shape[1]
    assert n % tm == 0 and n % tk == 0, "tile sizes must divide padded N"
    nb_r = n // tm
    max_nnz = blk_idx.shape[1]
    assert blk_idx.shape[0] == nb_r and blk_cnt.shape[0] == nb_r

    a_itm = a.dtype.itemsize
    xw_itm = xw.dtype.itemsize
    out_itm = jnp.dtype(out_dtype).itemsize

    if xw_resident:
        # Single DMA of the whole XW (constant index_map keeps it resident).
        xw_spec = pl.BlockSpec((n, fo), lambda i, k, bi, bc: (0, 0))
        xw_vmem = 2 * n * fo * xw_itm
        xw_bytes = n * fo * xw_itm
    else:
        # Stream only the nonzero column blocks, indexed via scalar prefetch.
        xw_spec = pl.BlockSpec((tk, fo), lambda i, k, bi, bc: (bi[i, k], 0))
        xw_vmem = 2 * tk * fo * xw_itm
        xw_bytes = nnz_blocks * tk * fo * xw_itm

    ws = (2 * tm * tk * a_itm      # double-buffered A tiles
          + xw_vmem                # XW (resident or streamed)
          + 2 * fo * 4             # bias
          + 2 * tm * fo * out_itm  # output tile
          + tm * fo * 4)           # f32 accumulator scratch

    # NOTE: if the trace still shows exposed DMA on A, try
    # pipeline_mode=pl.Buffered(3) on the A BlockSpec (one extra tile of VMEM).
    return pl.pallas_call(
        make_aggregate_kernel(apply_relu, tk, xw_resident),
        out_shape=jax.ShapeDtypeStruct((n, fo), out_dtype),
        grid_spec=pltpu.PrefetchScalarGridSpec(
            num_scalar_prefetch=2,
            grid=(nb_r, max_nnz),
            in_specs=[
                pl.BlockSpec((tm, tk), lambda i, k, bi, bc: (i, bi[i, k])),
                xw_spec,
                pl.BlockSpec((1, fo), lambda i, k, bi, bc: (0, 0)),
            ],
            out_specs=pl.BlockSpec((tm, fo), lambda i, k, bi, bc: (i, 0)),
            scratch_shapes=[pltpu.VMEM((tm, fo), jnp.float32)],
        ),
        compiler_params=pltpu.CompilerParams(
            dimension_semantics=("parallel", "arbitrary"),
            vmem_limit_bytes=_vmem_limit(ws),
        ),
        cost_estimate=pl.CostEstimate(
            flops=2 * nnz_blocks * tm * tk * fo,
            transcendentals=0,
            bytes_accessed=nnz_blocks * tm * tk * a_itm
            + xw_bytes
            + n * fo * out_itm
            + fo * 4,
        ),
    )(blk_idx, blk_cnt, a, xw, b)


# --------------- host-side block-sparsity schedule for the adjacency ---------
def _block_nonzero_schedule(a_dense, np_pad, tm, tk):
    """Per-row-tile compacted nonzero column-block indices (+ counts)."""
    a_np = np.zeros((np_pad, np_pad), np.float32)
    a_host = np.asarray(a_dense, dtype=np.float32)
    a_np[: a_host.shape[0], : a_host.shape[1]] = a_host
    nb_r, nb_c = np_pad // tm, np_pad // tk
    nz = np.abs(a_np.reshape(nb_r, tm, nb_c, tk)).sum(axis=(1, 3)) > 0.0
    cnt = nz.sum(axis=1).astype(np.int32)
    max_nnz = max(int(cnt.max()), 1)
    idx = np.zeros((nb_r, max_nnz), np.int32)
    for r in range(nb_r):
        cols = np.nonzero(nz[r])[0].astype(np.int32)
        c = cols.shape[0]
        if c:
            idx[r, :c] = cols
            idx[r, c:] = cols[-1]  # repeat last index -> no extra DMA for pads
    return idx, cnt, int(cnt.sum())


# ----------------------------- full GCN forward ------------------------------
def gcn_forward(a_norm, x, w1, b1, w2, b2, *, tm=256, tk=2048, tm_feat=1024,
                matmul_dtype=jnp.bfloat16):
    n, in_feats = x.shape
    h_feats = w1.shape[1]
    num_classes = w2.shape[1]

    # Pad node dim so all tiles divide it exactly (never silently drop rows),
    # and pad all feature dims to 128 lanes for full unmasked vst stores.
    np_lane = _pad_to(n, LANE)
    tk = min(tk, np_lane)
    np_pad = _pad_to(np_lane, tk)
    tm = _largest_tile(tk, tm)
    tm_feat = _largest_tile(np_pad, tm_feat)
    assert np_pad % tm == 0 and np_pad % tk == 0 and np_pad % tm_feat == 0

    fp = _pad_to(in_feats, LANE)
    hp = _pad_to(h_feats, LANE)
    cp = _pad_to(num_classes, LANE)

    a_p = _pad2d(a_norm, np_pad, np_pad).astype(matmul_dtype)
    x_p = _pad2d(x, np_pad, fp).astype(matmul_dtype)
    w1_p = _pad2d(w1, fp, hp).astype(matmul_dtype)
    w2_p = _pad2d(w2, hp, cp).astype(matmul_dtype)
    b1_p = _pad2d(b1, 1, hp).astype(jnp.float32)
    b2_p = _pad2d(b2, 1, cp).astype(jnp.float32)

    blk_idx_np, blk_cnt_np, nnz_blocks = _block_nonzero_schedule(
        a_norm, np_pad, tm, tk)
    blk_idx = jnp.asarray(blk_idx_np)
    blk_cnt = jnp.asarray(blk_cnt_np)

    def xw_fits(fo):
        return 2 * np_pad * fo * jnp.dtype(matmul_dtype).itemsize \
            <= XW_RESIDENT_BUDGET

    # Layer 1: H = relu(An @ (X W1) + b1), kept bf16 for layer 2's MXU.
    xw1 = feat_transform(x_p, w1_p, tm=tm_feat)
    h = aggregate(a_p, xw1, b1_p, blk_idx, blk_cnt, tm=tm, tk=tk,
                  apply_relu=True, out_dtype=matmul_dtype,
                  xw_resident=xw_fits(hp), nnz_blocks=nnz_blocks)

    # Layer 2: out = An @ (H W2) + b2, f32 output.
    hw2 = feat_transform(h, w2_p, tm=tm_feat)
    out = aggregate(a_p, hw2, b2_p, blk_idx, blk_cnt, tm=tm, tk=tk,
                    apply_relu=False, out_dtype=jnp.float32,
                    xw_resident=xw_fits(cp), nnz_blocks=nnz_blocks)

    return out[:n, :num_classes]


# ------------------------------- glue (plain JAX) ----------------------------
def normalized_adjacency(edge_index, num_nodes):
    """Dense D^-1/2 (A + I) D^-1/2 matching PyG gcn_norm.

    Mirrors add_remaining_self_loops: existing self-loops in edge_index are
    dropped and a single weight-1 self-loop is added per node.
    """
    src, dst = edge_index[0], edge_index[1]
    w = jnp.where(src != dst, 1.0, 0.0)
    a = jnp.zeros((num_nodes, num_nodes), jnp.float32).at[dst, src].add(w)
    a = a + jnp.eye(num_nodes, dtype=jnp.float32)
    deg = a.sum(axis=1)
    dinv = jnp.where(deg > 0.0, 1.0 / jnp.sqrt(deg), 0.0)
    return dinv[:, None] * a * dinv[None, :]


def reference_gcn(a_norm, x, w1, b1, w2, b2):
    h = a_norm @ (x @ w1) + b1
    h = jnp.maximum(h, 0.0)
    return a_norm @ (h @ w2) + b2


if __name__ == "__main__":
    key = jax.random.PRNGKey(0)
    k_x, k_e, k_w1, k_w2 = jax.random.split(key, 4)

    # Small, forward-consistent shapes.
    num_nodes = 16
    in_feats = 16
    h_feats = 32
    num_classes = 8
    num_edges = 48

    # Node features [N, in_feats].
    x = jax.random.normal(k_x, (num_nodes, in_feats), dtype=jnp.float32)

    # Deterministic random edge_index [2, E] (COO: row=source, col=target).
    edge_index = jax.random.randint(
        k_e, (2, num_edges), minval=0, maxval=num_nodes, dtype=jnp.int32
    )

    # Parameters (deterministic glorot-ish init, zero bias like PyG GCNConv).
    def glorot(k, fan_in, fan_out):
        limit = jnp.sqrt(6.0 / (fan_in + fan_out))
        return jax.random.uniform(
            k, (fan_in, fan_out), minval=-limit, maxval=limit, dtype=jnp.float32
        )

    w1 = glorot(k_w1, in_feats, h_feats)
    b1 = jnp.zeros((1, h_feats), jnp.float32)
    w2 = glorot(k_w2, h_feats, num_classes)
    b2 = jnp.zeros((1, num_classes), jnp.float32)

    a_norm = normalized_adjacency(edge_index, num_nodes)

    out = gcn_forward(a_norm, x, w1, b1, w2, b2)
    out = jax.block_until_ready(out)

    # f32 reference; kernel runs bf16 MXU inputs with f32 accumulation,
    # so validate with a correspondingly relaxed tolerance.
    ref = reference_gcn(a_norm, x, w1, b1, w2, b2)
    assert out.shape == (num_nodes, num_classes)
    assert jnp.allclose(out, ref, atol=5e-2, rtol=5e-2), (
        float(jnp.max(jnp.abs(out - ref)))
    )

    print("KERNEL_OK")
</pallas_src>

<mosaic_0001>
module attributes {stable_mosaic.version = 11 : i64} {
  func.func @feat_transform_kernel(%arg0: i32, %arg1: memref<128x128xbf16, #tpu.memory_space<vmem>>, %arg2: memref<128x128xbf16, #tpu.memory_space<vmem>>, %arg3: memref<128x128xbf16, #tpu.memory_space<vmem>>) attributes {dimension_semantics = [#tpu.dimension_semantics<parallel>], iteration_bounds = array<i64: 1>, scalar_prefetch = 0 : i64, scratch_operands = 0 : i64, tpu.core_type = #tpu.core_type<tc>, window_params = [{transform_indices = @transform_0, window_bounds = array<i64: 128, 128>}, {pipeline_mode = #tpu.pipeline_mode<synchronous>, transform_indices = @transform_1, window_bounds = array<i64: 128, 128>}, {transform_indices = @transform_2, window_bounds = array<i64: 128, 128>}]} {
    %c0 = arith.constant 0 : index
    %c0_0 = arith.constant 0 : index
    %0 = vector.load %arg1[%c0, %c0_0] : memref<128x128xbf16, #tpu.memory_space<vmem>>, vector<128x128xbf16>
    %c0_1 = arith.constant 0 : index
    %c0_2 = arith.constant 0 : index
    %1 = vector.load %arg2[%c0_1, %c0_2] : memref<128x128xbf16, #tpu.memory_space<vmem>>, vector<128x128xbf16>
    %cst = arith.constant dense<0.000000e+00> : vector<128x128xf32>
    %2 = tpu.matmul %0, %1, %cst {dimension_numbers = #tpu.dot_dimension_numbers<[1], [0], [0], [1], [0, 0, 1, 1], [], []>} : vector<128x128xbf16>, vector<128x128xbf16>, vector<128x128xf32> -> vector<128x128xf32>
    %3 = arith.truncf %2 : vector<128x128xf32> to vector<128x128xbf16>
    %c0_3 = arith.constant 0 : index
    %c0_4 = arith.constant 0 : index
    %4 = vector.load %arg3[%c0_3, %c0_4] : memref<128x128xbf16, #tpu.memory_space<vmem>>, vector<128x128xbf16>
    tpu.vector_store %arg3[%c0_3, %c0_4], %3 {strides = array<i32>} : memref<128x128xbf16, #tpu.memory_space<vmem>>, vector<128x128xbf16>,
    return
  }
  func.func @transform_0(%arg0: i32) -> (i32, i32) {
    %c0_i32 = arith.constant 0 : i32
    %c0_i32_0 = arith.constant 0 : i32
    return %arg0, %c0_i32 : i32, i32
  }
  func.func @transform_1(%arg0: i32) -> (i32, i32) {
    %c0_i32 = arith.constant 0 : i32
    %c0_i32_0 = arith.constant 0 : i32
    %c0_i32_1 = arith.constant 0 : i32
    return %c0_i32, %c0_i32_0 : i32, i32
  }
  func.func @transform_2(%arg0: i32) -> (i32, i32) {
    %c0_i32 = arith.constant 0 : i32
    %c0_i32_0 = arith.constant 0 : i32
    return %arg0, %c0_i32 : i32, i32
  }
}

</mosaic_0001>

<llo_original>
// kernel: tpu_custom_call.1
$region0: #{tpu_custom_call.1}
  #allocation0 [shape = 'u32[]', space=smem, size = 0x4, offset = 0x4, fixed_abs, tag = 'smem constant byte address 0x4 - core index']
  #allocation1 [shape = 'u32[144,128]{1,0:T(1,128)}', space=vmem, size = 0x12000, scoped, tag = 'internal scratch']
  %s0 = inlined_call_operand.hbm [shape: bf16[128,128], index: 0, kind: input, shape index: {}]
  %s1 = inlined_call_operand.hbm [shape: bf16[128,128], index: 1, kind: input, shape index: {}]
  %s2 = inlined_call_operand.hbm [shape: bf16[128,128], index: 2, kind: output, shape index: {}]
  %s3 = sld [smem:[#allocation0]]
  $region26: #{tpu_custom_call.1} parent=0
    _
  %s5 = ssub.s32 1, %s3
  %s6 = scalar_select 0, %s5, %s3
  $region1: #{tpu_custom_call.1} parent=0
    #allocation2 [shape = 'u8[32768]{0}', space=vmem, size = 0x8000, scoped, tag = 'input window, operand 0, single buffered']
    #allocation3 [shape = 's32[1]{0}', space=sflag, size = 0x4, scoped, tag = 'scoped memory for tpu_custom_call.1']
    #allocation4 [shape = 's32[1]{0}', space=sflag, size = 0x4, scoped, tag = 'scoped memory for tpu_custom_call.1']
    #allocation5 [shape = 'u8[32768]{0}', space=vmem, size = 0x8000, scoped, tag = 'input window, operand 1, single buffered']
    #allocation6 [shape = 's32[1]{0}', space=sflag, size = 0x4, scoped, tag = 'scoped memory for tpu_custom_call.1']
    #allocation7 [shape = 'u8[32768]{0}', space=vmem, size = 0x8000, scoped, tag = 'output window, operand 0, single buffered']
    %7 = vsyncpa [#allocation3], 0
    %8 = vsyncpa [#allocation6], 0
    %9 = vsyncpa [#allocation4], 0
    // Predicated region
    $region2: #{tpu_custom_call.1} parent=1 // pred_check
      _
    $region3: #{tpu_custom_call.1} parent=1 // pred_check_branch
      %11 = sbr.rel (0) target = $region5
    $region4: #{tpu_custom_call.1} parent=1 // pred_region
      %s13 = ssub.s32 1024, 1024
      %14 = vsyncadd [#allocation3], %s13
      %s15 = sshll.u32 [#allocation2], 4
      %s16 = int_to_ptr.vmem [resolvable:$true] %s15
      %21 = dma.hbm_to_vmem [thread:$0]  %s0, 1024, %s16, [#allocation3], 64, 64, 4
    $region5: #{tpu_custom_call.1} parent=1 // pred_fallthru
      _
    // Predicated region
    $region6: #{tpu_custom_call.1} parent=1 // pred_check
      _
    $region7: #{tpu_custom_call.1} parent=1 // pred_check_branch
      %23 = sbr.rel (0) target = $region9
    $region8: #{tpu_custom_call.1} parent=1 // pred_region
      %s25 = ssub.s32 1024, 1024
      %26 = vsyncadd [#allocation6], %s25
      %s27 = sshll.u32 [#allocation5], 4
      %s28 = int_to_ptr.vmem [resolvable:$true] %s27
      %33 = dma.hbm_to_vmem [thread:$0]  %s1, 1024, %s28, [#allocation6], 64, 64, 4
    $region9: #{tpu_custom_call.1} parent=1 // pred_fallthru
      _
    // Predicated region
    $region10: #{tpu_custom_call.1} parent=1 // pred_check
      _
    $region11: #{tpu_custom_call.1} parent=1 // pred_check_branch
      %35 = sbr.rel (0) target = $region13
    $region12: #{tpu_custom_call.1} parent=1 // pred_region
      %36 = dma.done [#allocation3], 1024
    $region13: #{tpu_custom_call.1} parent=1 // pred_fallthru
      _
    // Predicated region
    $region14: #{tpu_custom_call.1} parent=1 // pred_check
      _
    $region15: #{tpu_custom_call.1} parent=1 // pred_check_branch
      %38 = sbr.rel (0) target = $region17
    $region16: #{tpu_custom_call.1} parent=1 // pred_region
      %39 = dma.done [#allocation6], 1024
    $region17: #{tpu_custom_call.1} parent=1 // pred_fallthru
      _
    %v41 = vld [vmem:[#allocation2] sm:$0xf]
    %v42 = vld [vmem:[#allocation2 + $0x4] sm:$0xf]
    %v43 = vld [vmem:[#allocation2 + $0x8] sm:$0xf]
    %v44 = vld [vmem:[#allocation2 + $0xc] sm:$0xf]
    %v45 = vld [vmem:[#allocation2 + $0x10] sm:$0xf]
    %v46 = vld [vmem:[#allocation2 + $0x14] sm:$0xf]
    %v47 = vld [vmem:[#allocation2 + $0x18] sm:$0xf]
    %v48 = vld [vmem:[#allocation2 + $0x1c] sm:$0xf]
    %v49 = vld [vmem:[#allocation2 + $0x20] sm:$0xf]
    %v50 = vld [vmem:[#allocation2 + $0x24] sm:$0xf]
    %v51 = vld [vmem:[#allocation2 + $0x28] sm:$0xf]
    %v52 = vld [vmem:[#allocation2 + $0x2c] sm:$0xf]
    %v53 = vld [vmem:[#allocation2 + $0x30] sm:$0xf]
    %v54 = vld [vmem:[#allocation2 + $0x34] sm:$0xf]
    %v55 = vld [vmem:[#allocation2 + $0x38] sm:$0xf]
    %v56 = vld [vmem:[#allocation2 + $0x3c] sm:$0xf]
    %v57 = vld [vmem:[#allocation5] sm:$0xf]
    %v58 = vld [vmem:[#allocation5 + $0x4] sm:$0xf]
    %v59 = vld [vmem:[#allocation5 + $0x8] sm:$0xf]
    %v60 = vld [vmem:[#allocation5 + $0xc] sm:$0xf]
    %v61 = vld [vmem:[#allocation5 + $0x10] sm:$0xf]
    %v62 = vld [vmem:[#allocation5 + $0x14] sm:$0xf]
    %v63 = vld [vmem:[#allocation5 + $0x18] sm:$0xf]
    %v64 = vld [vmem:[#allocation5 + $0x1c] sm:$0xf]
    %v65 = vld [vmem:[#allocation5 + $0x20] sm:$0xf]
    %v66 = vld [vmem:[#allocation5 + $0x24] sm:$0xf]
    %v67 = vld [vmem:[#allocation5 + $0x28] sm:$0xf]
    %v68 = vld [vmem:[#allocation5 + $0x2c] sm:$0xf]
    %v69 = vld [vmem:[#allocation5 + $0x30] sm:$0xf]
    %v70 = vld [vmem:[#allocation5 + $0x34] sm:$0xf]
    %v71 = vld [vmem:[#allocation5 + $0x38] sm:$0xf]
    %v72 = vld [vmem:[#allocation5 + $0x3c] sm:$0xf]
    %v89 = vunpack.c.l.b16 %v41
    %v90 = vunpack.c.l.b16 %v42
    %v91 = vunpack.c.l.b16 %v43
    %v92 = vunpack.c.l.b16 %v44
    %v93 = vunpack.c.l.b16 %v45
    %v94 = vunpack.c.l.b16 %v46
    %v95 = vunpack.c.l.b16 %v47
    %v96 = vunpack.c.l.b16 %v48
    %v97 = vunpack.c.l.b16 %v49
    %v98 = vunpack.c.l.b16 %v50
    %v99 = vunpack.c.l.b16 %v51
    %v100 = vunpack.c.l.b16 %v52
    %v101 = vunpack.c.l.b16 %v53
    %v102 = vunpack.c.l.b16 %v54
    %v103 = vunpack.c.l.b16 %v55
    %v104 = vunpack.c.l.b16 %v56
    %v105 = vpack.c.b16 %v90, %v89
    %v106 = vpack.c.b16 %v92, %v91
    %v107 = vpack.c.b16 %v94, %v93
    %v108 = vpack.c.b16 %v96, %v95
    %v109 = vpack.c.b16 %v98, %v97
    %v110 = vpack.c.b16 %v100, %v99
    %v111 = vpack.c.b16 %v102, %v101
    %v112 = vpack.c.b16 %v104, %v103
    %v137 = vunpack.c.l.b16 %v57
    %v138 = vunpack.c.l.b16 %v58
    %v139 = vunpack.c.l.b16 %v59
    %v140 = vunpack.c.l.b16 %v60
    %v141 = vunpack.c.l.b16 %v61
    %v142 = vunpack.c.l.b16 %v62
    %v143 = vunpack.c.l.b16 %v63
    %v144 = vunpack.c.l.b16 %v64
    %v145 = vunpack.c.l.b16 %v65
    %v146 = vunpack.c.l.b16 %v66
    %v147 = vunpack.c.l.b16 %v67
    %v148 = vunpack.c.l.b16 %v68
    %v149 = vunpack.c.l.b16 %v69
    %v150 = vunpack.c.l.b16 %v70
    %v151 = vunpack.c.l.b16 %v71
    %v152 = vunpack.c.l.b16 %v72
    %v153 = vpack.c.b16 %v138, %v137
    %v154 = vpack.c.b16 %v140, %v139
    %v155 = vpack.c.b16 %v142, %v141
    %v156 = vpack.c.b16 %v144, %v143
    %v157 = vpack.c.b16 %v146, %v145
    %v158 = vpack.c.b16 %v148, %v147
    %v159 = vpack.c.b16 %v150, %v149
    %v160 = vpack.c.b16 %v152, %v151
    %169 = vmatprep.subr.bf16.mxu0 0
    %170 = vmatpush1.bf16.msra.mxu0 %v153
    %171 = vmatprep.subr.bf16.mxu0 0
    %172 = vmatpush1.bf16.msra.mxu0 %v154
    %173 = vmatprep.subr.bf16.mxu0 0
    %174 = vmatpush1.bf16.msra.mxu0 %v155
    %175 = vmatprep.subr.bf16.mxu0 0
    %176 = vmatpush1.bf16.msra.mxu0 %v156
    %177 = vmatprep.subr.bf16.mxu0 0
    %178 = vmatpush1.bf16.msra.mxu0 %v157
    %179 = vmatprep.subr.bf16.mxu0 0
    %180 = vmatpush1.bf16.msra.mxu0 %v158
    %181 = vmatprep.subr.bf16.mxu0 0
    %182 = vmatpush1.bf16.msra.mxu0 %v159
    %183 = vmatprep.subr.bf16.mxu0 0
    %184 = vmatpush1.bf16.msra.mxu0 %v160
    %185 = vmatprep.subr.bf16.mxu0 0
    %186 = vmatpush1.bf16.msra.mxu0 0
    %187 = vmatprep.subr.bf16.mxu0 0
    %188 = vmatpush1.bf16.msra.mxu0 0
    %189 = vmatprep.subr.bf16.mxu0 0
    %190 = vmatpush1.bf16.msra.mxu0 0
    %191 = vmatprep.subr.bf16.mxu0 0
    %192 = vmatpush1.bf16.msra.mxu0 0
    %193 = vmatprep.subr.bf16.mxu0 0
    %194 = vmatpush1.bf16.msra.mxu0 0
    %195 = vmatprep.subr.bf16.mxu0 0
    %196 = vmatpush1.bf16.msra.mxu0 0
    %197 = vmatprep.subr.bf16.mxu0 0
    %198 = vmatpush1.bf16.msra.mxu0 0
    %199 = vmatprep.subr.bf16.mxu0 0
    %200 = vmatpush1.bf16.msra.mxu0 0
    %201 = vmatprep.mubr.bf16.mxu0 0
    %202 = vmatmul.mubr.bf16.gmra.mrb[0].mxu0 %v105
    %v203 = vpop.f32.mrb[0].mxu0
    %v204 = vadd.f32 0.0, %v203
    %v205 = vpop.f32.mrb[0].mxu0
    %v206 = vpop.f32.mrb[0].mxu0
    %v207 = vadd.f32 0.0, %v206
    %v208 = vpop.f32.mrb[0].mxu0
    %209 = vmatprep.mubr.bf16.mxu0 0
    %210 = vmatmul.mubr.bf16.gmra.mrb[0].mxu0 %v106
    %v211 = vpop.f32.mrb[0].mxu0
    %v212 = vadd.f32 0.0, %v211
    %v213 = vpop.f32.mrb[0].mxu0
    %v214 = vpop.f32.mrb[0].mxu0
    %v215 = vadd.f32 0.0, %v214
    %v216 = vpop.f32.mrb[0].mxu0
    %217 = vmatprep.mubr.bf16.mxu0 0
    %218 = vmatmul.mubr.bf16.gmra.mrb[0].mxu0 %v107
    %v219 = vpop.f32.mrb[0].mxu0
    %v220 = vadd.f32 0.0, %v219
    %v221 = vpop.f32.mrb[0].mxu0
    %v222 = vpop.f32.mrb[0].mxu0
    %v223 = vadd.f32 0.0, %v222
    %v224 = vpop.f32.mrb[0].mxu0
    %225 = vmatprep.mubr.bf16.mxu0 0
    %226 = vmatmul.mubr.bf16.gmra.mrb[0].mxu0 %v108
    %v227 = vpop.f32.mrb[0].mxu0
    %v228 = vadd.f32 0.0, %v227
    %v229 = vpop.f32.mrb[0].mxu0
    %v230 = vpop.f32.mrb[0].mxu0
    %v231 = vadd.f32 0.0, %v230
    %v232 = vpop.f32.mrb[0].mxu0
    %233 = vmatprep.mubr.bf16.mxu0 0
    %234 = vmatmul.mubr.bf16.gmra.mrb[0].mxu0 %v109
    %v235 = vpop.f32.mrb[0].mxu0
    %v236 = vadd.f32 0.0, %v235
    %v237 = vpop.f32.mrb[0].mxu0
    %v238 = vpop.f32.mrb[0].mxu0
    %v239 = vadd.f32 0.0, %v238
    %v240 = vpop.f32.mrb[0].mxu0
    %241 = vmatprep.mubr.bf16.mxu0 0
    %242 = vmatmul.mubr.bf16.gmra.mrb[0].mxu0 %v110
    %v243 = vpop.f32.mrb[0].mxu0
    %v244 = vadd.f32 0.0, %v243
    %v245 = vpop.f32.mrb[0].mxu0
    %v246 = vpop.f32.mrb[0].mxu0
    %v247 = vadd.f32 0.0, %v246
    %v248 = vpop.f32.mrb[0].mxu0
    %249 = vmatprep.mubr.bf16.mxu0 0
    %250 = vmatmul.mubr.bf16.gmra.mrb[0].mxu0 %v111
    %v251 = vpop.f32.mrb[0].mxu0
    %v252 = vadd.f32 0.0, %v251
    %v253 = vpop.f32.mrb[0].mxu0
    %v254 = vpop.f32.mrb[0].mxu0
    %v255 = vadd.f32 0.0, %v254
    %v256 = vpop.f32.mrb[0].mxu0
    %257 = vmatprep.mubr.bf16.mxu0 0
    %258 = vmatmul.mubr.bf16.gmra.mrb[0].mxu0 %v112
    %v259 = vpop.f32.mrb[0].mxu0
    %v260 = vadd.f32 0.0, %v259
    %v261 = vpop.f32.mrb[0].mxu0
    %v262 = vpop.f32.mrb[0].mxu0
    %v263 = vadd.f32 0.0, %v262
    %v264 = vpop.f32.mrb[0].mxu0
    %265 = vdwg.mxu0
    %v266 = vpack.c.bf16 %v207, %v204
    %v267 = vpack.c.bf16 %v215, %v212
    %v268 = vpack.c.bf16 %v223, %v220
    %v269 = vpack.c.bf16 %v231, %v228
    %v270 = vpack.c.bf16 %v239, %v236
    %v271 = vpack.c.bf16 %v247, %v244
    %v272 = vpack.c.bf16 %v255, %v252
    %v273 = vpack.c.bf16 %v263, %v260
    %v282 = vunpack.c.l.b16 %v266
    %v283 = vunpack.c.h.b16 %v266
    %v284 = vunpack.c.l.b16 %v267
    %v285 = vunpack.c.h.b16 %v267
    %v286 = vunpack.c.l.b16 %v268
    %v287 = vunpack.c.h.b16 %v268
    %v288 = vunpack.c.l.b16 %v269
    %v289 = vunpack.c.h.b16 %v269
    %v290 = vunpack.c.l.b16 %v270
    %v291 = vunpack.c.h.b16 %v270
    %v292 = vunpack.c.l.b16 %v271
    %v293 = vunpack.c.h.b16 %v271
    %v294 = vunpack.c.l.b16 %v272
    %v295 = vunpack.c.h.b16 %v272
    %v296 = vunpack.c.l.b16 %v273
    %v297 = vunpack.c.h.b16 %v273
    %v298 = vpack.c.b16 %v282, %v282
    %v299 = vpack.c.b16 %v283, %v283
    %v300 = vpack.c.b16 %v284, %v284
    %v301 = vpack.c.b16 %v285, %v285
    %v302 = vpack.c.b16 %v286, %v286
    %v303 = vpack.c.b16 %v287, %v287
    %v304 = vpack.c.b16 %v288, %v288
    %v305 = vpack.c.b16 %v289, %v289
    %v306 = vpack.c.b16 %v290, %v290
    %v307 = vpack.c.b16 %v291, %v291
    %v308 = vpack.c.b16 %v292, %v292
    %v309 = vpack.c.b16 %v293, %v293
    %v310 = vpack.c.b16 %v294, %v294
    %v311 = vpack.c.b16 %v295, %v295
    %v312 = vpack.c.b16 %v296, %v296
    %v313 = vpack.c.b16 %v297, %v297
    %330 = vst [vmem:[#allocation7] sm:$0xf] %v298
    %331 = vst [vmem:[#allocation7 + $0x4] sm:$0xf] %v299
    %332 = vst [vmem:[#allocation7 + $0x8] sm:$0xf] %v300
    %333 = vst [vmem:[#allocation7 + $0xc] sm:$0xf] %v301
    %334 = vst [vmem:[#allocation7 + $0x10] sm:$0xf] %v302
    %335 = vst [vmem:[#allocation7 + $0x14] sm:$0xf] %v303
    %336 = vst [vmem:[#allocation7 + $0x18] sm:$0xf] %v304
    %337 = vst [vmem:[#allocation7 + $0x1c] sm:$0xf] %v305
    %338 = vst [vmem:[#allocation7 + $0x20] sm:$0xf] %v306
    %339 = vst [vmem:[#allocation7 + $0x24] sm:$0xf] %v307
    %340 = vst [vmem:[#allocation7 + $0x28] sm:$0xf] %v308
    %341 = vst [vmem:[#allocation7 + $0x2c] sm:$0xf] %v309
    %342 = vst [vmem:[#allocation7 + $0x30] sm:$0xf] %v310
    %343 = vst [vmem:[#allocation7 + $0x34] sm:$0xf] %v311
    %344 = vst [vmem:[#allocation7 + $0x38] sm:$0xf] %v312
    %345 = vst [vmem:[#allocation7 + $0x3c] sm:$0xf] %v313
    // Predicated region
    $region18: #{tpu_custom_call.1} parent=1 // pred_check
      _
    $region19: #{tpu_custom_call.1} parent=1 // pred_check_branch
      %347 = sbr.rel (0) target = $region21
    $region20: #{tpu_custom_call.1} parent=1 // pred_region
      %s349 = ssub.s32 1024, 1024
      %350 = vsyncadd [#allocation4], %s349
      %s351 = sshll.u32 [#allocation7], 4
      %s352 = int_to_ptr.vmem [resolvable:$true] %s351
      %357 = dma.vmem_to_hbm [thread:$0]  %s352, 1024, %s2, [#allocation4], 64, 64, 4
    $region21: #{tpu_custom_call.1} parent=1 // pred_fallthru
      _
    // Predicated region
    $region22: #{tpu_custom_call.1} parent=1 // pred_check
      _
    $region23: #{tpu_custom_call.1} parent=1 // pred_check_branch
      %359 = sbr.rel (0) target = $region25
    $region24: #{tpu_custom_call.1} parent=1 // pred_region
      %360 = dma.done [#allocation4], 1024
    $region25: #{tpu_custom_call.1} parent=1 // pred_fallthru
      _
    %361 = vsyncpa [#allocation3], 1
    %362 = vsyncpa [#allocation6], 1
    %363 = vsyncpa [#allocation4], 1

</llo_original>
